<compile_context>
chip_gen: v7x
topology: tpu7x:2x2x1
jax: 0.10.0
libtpu: 0.0.40
codegen_flags: <defaults>
</compile_context>

<pallas_src>
import jax
import jax.numpy as jnp
import numpy as np
from jax.experimental import pallas as pl
from jax.experimental.pallas import tpu as pltpu

OUT_LANES = 8  # pad the 1-wide output/weight column to the 8-sublane minimum


# --------------------------------------------------------------------------
# Kernel: one batch tile -> [tile, d_in] @ [d_in, 8] + [1, 8]
# --------------------------------------------------------------------------
def affine_kernel(x_ref, w_ref, b_ref, o_ref):
    o_ref[...] = (
        jnp.dot(x_ref[...], w_ref[...], preferred_element_type=jnp.float32)
        + b_ref[...]
    ).astype(o_ref.dtype)


# --------------------------------------------------------------------------
# One-time parameter fold (call at model-load time, NOT per forward call).
# --------------------------------------------------------------------------
def fold_mlp_params(params, *, weight_dtype=jnp.float32, training=False):
    """Collapse the Linear(+eval-mode Dropout) chain into (W_pad, b_pad, d_out).

    The fold itself stays in f32 at Precision.HIGHEST (the folded entries are
    products of five small-std layers); only the stored runtime weight may be
    downcast via `weight_dtype`.  Returns W padded to a multiple of OUT_LANES
    output columns (zero-filled), bias kept in f32, and the true output width.
    """
    if training:
        raise NotImplementedError(
            "Affine folding is only valid in eval mode (Dropout == identity); "
            "training-mode dropout is not implemented."
        )
    hi = jax.lax.Precision.HIGHEST
    w, b = params[0]
    w = w.astype(jnp.float32)
    b = b.reshape(1, -1).astype(jnp.float32)
    for wi, bi in params[1:]:
        wi = wi.astype(jnp.float32)
        bi = bi.reshape(1, -1).astype(jnp.float32)
        w = jnp.dot(w, wi, precision=hi)
        b = jnp.dot(b, wi, precision=hi) + bi
    d_out = w.shape[1]
    pad = (-d_out) % OUT_LANES
    w_pad = jnp.pad(w, ((0, 0), (0, pad))).astype(weight_dtype)
    b_pad = jnp.pad(b, ((0, 0), (0, pad)))  # bias stays f32 (tiny)
    return w_pad, b_pad, d_out


def _default_tile(batch):
    """Single fat step for small B (v5e/v6e single-TC); two even steps for
    large B so v7x's two TensorCores both get work on the 'parallel' axis."""
    if batch <= 256:
        return batch
    half = -(-batch // 2)
    return min(-(-half // 8) * 8, 1024)


# --------------------------------------------------------------------------
# Forward pass: uses pre-folded parameters.
# --------------------------------------------------------------------------
def mlp_forward(x, folded, *, batch_tile=None):
    """x: [B, input_size].  folded: output of fold_mlp_params.  Returns [B, 1]."""
    w_pad, b_pad, d_out = folded
    B, d_in = x.shape
    assert w_pad.shape[0] == d_in, (w_pad.shape, d_in)
    n_lanes = w_pad.shape[1]

    tile = batch_tile if batch_tile is not None else _default_tile(B)
    tile = min(tile, B)
    if tile != B:
        tile = max(8, (tile // 8) * 8)  # block rows must be a multiple of 8
    grid = (pl.cdiv(B, tile),)  # ragged tail handled by Pallas (OOB writes dropped)

    itemsize = jnp.dtype(x.dtype).itemsize
    w_itemsize = jnp.dtype(w_pad.dtype).itemsize
    cost = pl.CostEstimate(
        flops=2 * B * d_in * n_lanes,
        transcendentals=0,
        bytes_accessed=(
            x.size * itemsize
            + w_pad.size * w_itemsize
            + b_pad.size * 4
            + B * n_lanes * 4
        ),
    )

    out = pl.pallas_call(
        affine_kernel,
        out_shape=jax.ShapeDtypeStruct((B, n_lanes), jnp.float32),
        grid_spec=pltpu.PrefetchScalarGridSpec(
            num_scalar_prefetch=0,
            grid=grid,
            in_specs=[
                pl.BlockSpec((tile, d_in), lambda i: (i, 0)),     # x tile
                pl.BlockSpec((d_in, n_lanes), lambda i: (0, 0)),  # W_total (invariant)
                pl.BlockSpec((1, n_lanes), lambda i: (0, 0)),     # b_total (invariant)
            ],
            out_specs=pl.BlockSpec((tile, n_lanes), lambda i: (i, 0)),
        ),
        compiler_params=pltpu.CompilerParams(
            dimension_semantics=("parallel",),
        ),
        cost_estimate=cost,
    )(x, w_pad, b_pad)

    return out[:, :d_out]


# --------------------------------------------------------------------------
# Parameter init matching the PyTorch module (weights stored as [in, out]).
# --------------------------------------------------------------------------
def init_params(key, input_size):
    dims = [input_size, 1024, 128, 64, 16, 1]
    std = 1.0 / (input_size + 1)
    params = []
    keys = jax.random.split(key, len(dims) - 1)
    for k, d_i, d_o in zip(keys, dims[:-1], dims[1:]):
        w = std * jax.random.normal(k, (d_i, d_o), dtype=jnp.float32)
        b = jnp.zeros((1, d_o), dtype=jnp.float32)
        params.append((w, b))
    return params


def mlp_reference(x, params):
    """Layered float64 host reference (dropout == identity at eval)."""
    h = np.asarray(x, dtype=np.float64)
    for w, b in params:
        h = h @ np.asarray(w, np.float64) + np.asarray(b, np.float64)
    return h


if __name__ == "__main__":
    input_size = 768  # ImageReward feature width (module's constructor arg)
    batch = 32        # small demo batch

    key = jax.random.PRNGKey(0)
    k_x, k_p = jax.random.split(key)
    x = jax.random.normal(k_x, (batch, input_size), dtype=jnp.float32)
    params = init_params(k_p, input_size)

    # One-time fold at "model load"; reused by every forward call.
    folded = fold_mlp_params(params)
    folded = jax.block_until_ready(folded)

    out = mlp_forward(x, folded)
    out = jax.block_until_ready(out)

    ref = mlp_reference(x, params)
    assert out.shape == (batch, 1), out.shape
    out64 = np.asarray(out, dtype=np.float64)
    rel_err = float(np.max(np.abs(out64 - ref)) / (np.max(np.abs(ref)) + 1e-30))
    assert rel_err < 2e-2, f"relative error too large: {rel_err}"
    print("KERNEL_OK")
</pallas_src>

<mosaic_0001>
module attributes {stable_mosaic.version = 11 : i64} {
  func.func @affine_kernel(%arg0: i32, %arg1: memref<32x768xf32, #tpu.memory_space<vmem>>, %arg2: memref<768x8xf32, #tpu.memory_space<vmem>>, %arg3: memref<1x8xf32, #tpu.memory_space<vmem>>, %arg4: memref<32x8xf32, #tpu.memory_space<vmem>>) attributes {dimension_semantics = [#tpu.dimension_semantics<parallel>], iteration_bounds = array<i64: 1>, scalar_prefetch = 0 : i64, scratch_operands = 0 : i64, tpu.core_type = #tpu.core_type<tc>, window_params = [{transform_indices = @transform_0, window_bounds = array<i64: 32, 768>}, {pipeline_mode = #tpu.pipeline_mode<synchronous>, transform_indices = @transform_1, window_bounds = array<i64: 768, 8>}, {pipeline_mode = #tpu.pipeline_mode<synchronous>, transform_indices = @transform_2, window_bounds = array<i64: 1, 8>}, {transform_indices = @transform_3, window_bounds = array<i64: 32, 8>}]} {
    %c0 = arith.constant 0 : index
    %c0_0 = arith.constant 0 : index
    %0 = vector.load %arg1[%c0, %c0_0] : memref<32x768xf32, #tpu.memory_space<vmem>>, vector<32x768xf32>
    %c0_1 = arith.constant 0 : index
    %c0_2 = arith.constant 0 : index
    %1 = vector.load %arg2[%c0_1, %c0_2] : memref<768x8xf32, #tpu.memory_space<vmem>>, vector<768x8xf32>
    %cst = arith.constant dense<0.000000e+00> : vector<32x8xf32>
    %2 = tpu.matmul %0, %1, %cst {dimension_numbers = #tpu.dot_dimension_numbers<[1], [0], [0], [1], [0, 0, 1, 1], [], []>} : vector<32x768xf32>, vector<768x8xf32>, vector<32x8xf32> -> vector<32x8xf32>
    %c0_3 = arith.constant 0 : index
    %c0_4 = arith.constant 0 : index
    %3 = vector.load %arg3[%c0_3, %c0_4] : memref<1x8xf32, #tpu.memory_space<vmem>>, vector<1x8xf32>
    %4 = vector.broadcast %3 : vector<1x8xf32> to vector<32x8xf32>
    %5 = arith.addf %2, %4 : vector<32x8xf32>
    %c0_5 = arith.constant 0 : index
    %c0_6 = arith.constant 0 : index
    %6 = vector.load %arg4[%c0_5, %c0_6] : memref<32x8xf32, #tpu.memory_space<vmem>>, vector<32x8xf32>
    tpu.vector_store %arg4[%c0_5, %c0_6], %5 {strides = array<i32>} : memref<32x8xf32, #tpu.memory_space<vmem>>, vector<32x8xf32>,
    return
  }
  func.func @transform_0(%arg0: i32) -> (i32, i32) {
    %c0_i32 = arith.constant 0 : i32
    %c0_i32_0 = arith.constant 0 : i32
    return %arg0, %c0_i32 : i32, i32
  }
  func.func @transform_1(%arg0: i32) -> (i32, i32) {
    %c0_i32 = arith.constant 0 : i32
    %c0_i32_0 = arith.constant 0 : i32
    %c0_i32_1 = arith.constant 0 : i32
    return %c0_i32, %c0_i32_0 : i32, i32
  }
  func.func @transform_2(%arg0: i32) -> (i32, i32) {
    %c0_i32 = arith.constant 0 : i32
    %c0_i32_0 = arith.constant 0 : i32
    %c0_i32_1 = arith.constant 0 : i32
    return %c0_i32, %c0_i32_0 : i32, i32
  }
  func.func @transform_3(%arg0: i32) -> (i32, i32) {
    %c0_i32 = arith.constant 0 : i32
    %c0_i32_0 = arith.constant 0 : i32
    return %arg0, %c0_i32 : i32, i32
  }
}

</mosaic_0001>

<llo_original>
// kernel: tpu_custom_call.1
$region0: #{tpu_custom_call.1}
  #allocation0 [shape = 'u32[]', space=smem, size = 0x4, offset = 0x4, fixed_abs, tag = 'smem constant byte address 0x4 - core index']
  #allocation1 [shape = 'u32[144,128]{1,0:T(1,128)}', space=vmem, size = 0x12000, scoped, tag = 'internal scratch']
  %s0 = inlined_call_operand.vmem [shape: f32[32,768], index: 0, kind: input, shape index: {}]
  %s1 = inlined_call_operand.vmem [shape: f32[768,8], index: 1, kind: input, shape index: {}]
  %s2 = inlined_call_operand.vmem [shape: f32[1,8], index: 2, kind: input, shape index: {}]
  %s3 = inlined_call_operand.vmem [shape: f32[32,8], index: 3, kind: output, shape index: {}]
  %s4 = sld [smem:[#allocation0]]
  $region22: #{tpu_custom_call.1} parent=0
    _
  %s6 = ssub.s32 1, %s4
  %s7 = scalar_select 0, %s6, %s4
  // Predicated region
  $region2: #{tpu_custom_call.1} parent=0 // pred_check
    _
  $region3: #{tpu_custom_call.1} parent=0 // pred_check_branch
    %9 = sbr.rel (0) target = $region5
  $region4: #{tpu_custom_call.1} parent=0 // pred_region
    _
  $region5: #{tpu_custom_call.1} parent=0 // pred_fallthru
    _
  // Predicated region
  $region6: #{tpu_custom_call.1} parent=0 // pred_check
    _
  $region7: #{tpu_custom_call.1} parent=0 // pred_check_branch
    %11 = sbr.rel (0) target = $region9
  $region8: #{tpu_custom_call.1} parent=0 // pred_region
    _
  $region9: #{tpu_custom_call.1} parent=0 // pred_fallthru
    _
  // Predicated region
  $region10: #{tpu_custom_call.1} parent=0 // pred_check
    _
  $region11: #{tpu_custom_call.1} parent=0 // pred_check_branch
    %13 = sbr.rel (0) target = $region13
  $region12: #{tpu_custom_call.1} parent=0 // pred_region
    _
  $region13: #{tpu_custom_call.1} parent=0 // pred_fallthru
    _
  %v14 = vld [vmem:[%s0] sm:$0xff]
  %v15 = vld [vmem:[%s0 + $0x8] sm:$0xff]
  %v16 = vld [vmem:[%s0 + $0x10] sm:$0xff]
  %v17 = vld [vmem:[%s0 + $0x18] sm:$0xff]
  %v18 = vld [vmem:[%s0 + $0x20] sm:$0xff]
  %v19 = vld [vmem:[%s0 + $0x28] sm:$0xff]
  %v20 = vld [vmem:[%s0 + $0x30] sm:$0xff]
  %v21 = vld [vmem:[%s0 + $0x38] sm:$0xff]
  %v22 = vld [vmem:[%s0 + $0x40] sm:$0xff]
  %v23 = vld [vmem:[%s0 + $0x48] sm:$0xff]
  %v24 = vld [vmem:[%s0 + $0x50] sm:$0xff]
  %v25 = vld [vmem:[%s0 + $0x58] sm:$0xff]
  %v26 = vld [vmem:[%s0 + $0x60] sm:$0xff]
  %v27 = vld [vmem:[%s0 + $0x68] sm:$0xff]
  %v28 = vld [vmem:[%s0 + $0x70] sm:$0xff]
  %v29 = vld [vmem:[%s0 + $0x78] sm:$0xff]
  %v30 = vld [vmem:[%s0 + $0x80] sm:$0xff]
  %v31 = vld [vmem:[%s0 + $0x88] sm:$0xff]
  %v32 = vld [vmem:[%s0 + $0x90] sm:$0xff]
  %v33 = vld [vmem:[%s0 + $0x98] sm:$0xff]
  %v34 = vld [vmem:[%s0 + $0xa0] sm:$0xff]
  %v35 = vld [vmem:[%s0 + $0xa8] sm:$0xff]
  %v36 = vld [vmem:[%s0 + $0xb0] sm:$0xff]
  %v37 = vld [vmem:[%s0 + $0xb8] sm:$0xff]
  %v38 = vld [vmem:[%s1] sm:$0xff]
  %v39 = vld [vmem:[%s1 + $0x8] sm:$0xff]
  %v40 = vld [vmem:[%s1 + $0x10] sm:$0xff]
  %v41 = vld [vmem:[%s1 + $0x18] sm:$0xff]
  %v42 = vld [vmem:[%s1 + $0x20] sm:$0xff]
  %v43 = vld [vmem:[%s1 + $0x28] sm:$0xff]
  %v44 = vld [vmem:[%s1 + $0x30] sm:$0xff]
  %v45 = vld [vmem:[%s1 + $0x38] sm:$0xff]
  %v46 = vld [vmem:[%s1 + $0x40] sm:$0xff]
  %v47 = vld [vmem:[%s1 + $0x48] sm:$0xff]
  %v48 = vld [vmem:[%s1 + $0x50] sm:$0xff]
  %v49 = vld [vmem:[%s1 + $0x58] sm:$0xff]
  %v50 = vld [vmem:[%s1 + $0x60] sm:$0xff]
  %v51 = vld [vmem:[%s1 + $0x68] sm:$0xff]
  %v52 = vld [vmem:[%s1 + $0x70] sm:$0xff]
  %v53 = vld [vmem:[%s1 + $0x78] sm:$0xff]
  %v54 = vld [vmem:[%s1 + $0x80] sm:$0xff]
  %v55 = vld [vmem:[%s1 + $0x88] sm:$0xff]
  %v56 = vld [vmem:[%s1 + $0x90] sm:$0xff]
  %v57 = vld [vmem:[%s1 + $0x98] sm:$0xff]
  %v58 = vld [vmem:[%s1 + $0xa0] sm:$0xff]
  %v59 = vld [vmem:[%s1 + $0xa8] sm:$0xff]
  %v60 = vld [vmem:[%s1 + $0xb0] sm:$0xff]
  %v61 = vld [vmem:[%s1 + $0xb8] sm:$0xff]
  %v62 = vld [vmem:[%s1 + $0xc0] sm:$0xff]
  %v63 = vld [vmem:[%s1 + $0xc8] sm:$0xff]
  %v64 = vld [vmem:[%s1 + $0xd0] sm:$0xff]
  %v65 = vld [vmem:[%s1 + $0xd8] sm:$0xff]
  %v66 = vld [vmem:[%s1 + $0xe0] sm:$0xff]
  %v67 = vld [vmem:[%s1 + $0xe8] sm:$0xff]
  %v68 = vld [vmem:[%s1 + $0xf0] sm:$0xff]
  %v69 = vld [vmem:[%s1 + $0xf8] sm:$0xff]
  %v70 = vld [vmem:[%s1 + $0x100] sm:$0xff]
  %v71 = vld [vmem:[%s1 + $0x108] sm:$0xff]
  %v72 = vld [vmem:[%s1 + $0x110] sm:$0xff]
  %v73 = vld [vmem:[%s1 + $0x118] sm:$0xff]
  %v74 = vld [vmem:[%s1 + $0x120] sm:$0xff]
  %v75 = vld [vmem:[%s1 + $0x128] sm:$0xff]
  %v76 = vld [vmem:[%s1 + $0x130] sm:$0xff]
  %v77 = vld [vmem:[%s1 + $0x138] sm:$0xff]
  %v78 = vld [vmem:[%s1 + $0x140] sm:$0xff]
  %v79 = vld [vmem:[%s1 + $0x148] sm:$0xff]
  %v80 = vld [vmem:[%s1 + $0x150] sm:$0xff]
  %v81 = vld [vmem:[%s1 + $0x158] sm:$0xff]
  %v82 = vld [vmem:[%s1 + $0x160] sm:$0xff]
  %v83 = vld [vmem:[%s1 + $0x168] sm:$0xff]
  %v84 = vld [vmem:[%s1 + $0x170] sm:$0xff]
  %v85 = vld [vmem:[%s1 + $0x178] sm:$0xff]
  %v86 = vld [vmem:[%s1 + $0x180] sm:$0xff]
  %v87 = vld [vmem:[%s1 + $0x188] sm:$0xff]
  %v88 = vld [vmem:[%s1 + $0x190] sm:$0xff]
  %v89 = vld [vmem:[%s1 + $0x198] sm:$0xff]
  %v90 = vld [vmem:[%s1 + $0x1a0] sm:$0xff]
  %v91 = vld [vmem:[%s1 + $0x1a8] sm:$0xff]
  %v92 = vld [vmem:[%s1 + $0x1b0] sm:$0xff]
  %v93 = vld [vmem:[%s1 + $0x1b8] sm:$0xff]
  %v94 = vld [vmem:[%s1 + $0x1c0] sm:$0xff]
  %v95 = vld [vmem:[%s1 + $0x1c8] sm:$0xff]
  %v96 = vld [vmem:[%s1 + $0x1d0] sm:$0xff]
  %v97 = vld [vmem:[%s1 + $0x1d8] sm:$0xff]
  %v98 = vld [vmem:[%s1 + $0x1e0] sm:$0xff]
  %v99 = vld [vmem:[%s1 + $0x1e8] sm:$0xff]
  %v100 = vld [vmem:[%s1 + $0x1f0] sm:$0xff]
  %v101 = vld [vmem:[%s1 + $0x1f8] sm:$0xff]
  %v102 = vld [vmem:[%s1 + $0x200] sm:$0xff]
  %v103 = vld [vmem:[%s1 + $0x208] sm:$0xff]
  %v104 = vld [vmem:[%s1 + $0x210] sm:$0xff]
  %v105 = vld [vmem:[%s1 + $0x218] sm:$0xff]
  %v106 = vld [vmem:[%s1 + $0x220] sm:$0xff]
  %v107 = vld [vmem:[%s1 + $0x228] sm:$0xff]
  %v108 = vld [vmem:[%s1 + $0x230] sm:$0xff]
  %v109 = vld [vmem:[%s1 + $0x238] sm:$0xff]
  %v110 = vld [vmem:[%s1 + $0x240] sm:$0xff]
  %v111 = vld [vmem:[%s1 + $0x248] sm:$0xff]
  %v112 = vld [vmem:[%s1 + $0x250] sm:$0xff]
  %v113 = vld [vmem:[%s1 + $0x258] sm:$0xff]
  %v114 = vld [vmem:[%s1 + $0x260] sm:$0xff]
  %v115 = vld [vmem:[%s1 + $0x268] sm:$0xff]
  %v116 = vld [vmem:[%s1 + $0x270] sm:$0xff]
  %v117 = vld [vmem:[%s1 + $0x278] sm:$0xff]
  %v118 = vld [vmem:[%s1 + $0x280] sm:$0xff]
  %v119 = vld [vmem:[%s1 + $0x288] sm:$0xff]
  %v120 = vld [vmem:[%s1 + $0x290] sm:$0xff]
  %v121 = vld [vmem:[%s1 + $0x298] sm:$0xff]
  %v122 = vld [vmem:[%s1 + $0x2a0] sm:$0xff]
  %v123 = vld [vmem:[%s1 + $0x2a8] sm:$0xff]
  %v124 = vld [vmem:[%s1 + $0x2b0] sm:$0xff]
  %v125 = vld [vmem:[%s1 + $0x2b8] sm:$0xff]
  %v126 = vld [vmem:[%s1 + $0x2c0] sm:$0xff]
  %v127 = vld [vmem:[%s1 + $0x2c8] sm:$0xff]
  %v128 = vld [vmem:[%s1 + $0x2d0] sm:$0xff]
  %v129 = vld [vmem:[%s1 + $0x2d8] sm:$0xff]
  %v130 = vld [vmem:[%s1 + $0x2e0] sm:$0xff]
  %v131 = vld [vmem:[%s1 + $0x2e8] sm:$0xff]
  %v132 = vld [vmem:[%s1 + $0x2f0] sm:$0xff]
  %v133 = vld [vmem:[%s1 + $0x2f8] sm:$0xff]
  %v134 = vld [vmem:[%s2] sm:$0x1]
  %v136 = vlaneseq
  %v137 = vshrl.u32 %v136, 7
  %v138 = vsub.s32 0, %v137
  %v139 = vrot.slane %v134, %v138
  %141 = vmatprep.subr.mxu0 0.0
  %142 = vmatpush1.msra.mxu0 %v38
  %143 = vmatprep.subr.mxu0 0.0
  %144 = vmatpush1.msra.mxu0 %v39
  %145 = vmatprep.subr.mxu0 0.0
  %146 = vmatpush1.msra.mxu0 %v40
  %147 = vmatprep.subr.mxu0 0.0
  %148 = vmatpush1.msra.mxu0 %v41
  %149 = vmatprep.subr.mxu0 0.0
  %150 = vmatpush1.msra.mxu0 %v42
  %151 = vmatprep.subr.mxu0 0.0
  %152 = vmatpush1.msra.mxu0 %v43
  %153 = vmatprep.subr.mxu0 0.0
  %154 = vmatpush1.msra.mxu0 %v44
  %155 = vmatprep.subr.mxu0 0.0
  %156 = vmatpush1.msra.mxu0 %v45
  %157 = vmatprep.subr.mxu0 0.0
  %158 = vmatpush1.msra.mxu0 %v46
  %159 = vmatprep.subr.mxu0 0.0
  %160 = vmatpush1.msra.mxu0 %v47
  %161 = vmatprep.subr.mxu0 0.0
  %162 = vmatpush1.msra.mxu0 %v48
  %163 = vmatprep.subr.mxu0 0.0
  %164 = vmatpush1.msra.mxu0 %v49
  %165 = vmatprep.subr.mxu0 0.0
  %166 = vmatpush1.msra.mxu0 %v50
  %167 = vmatprep.subr.mxu0 0.0
  %168 = vmatpush1.msra.mxu0 %v51
  %169 = vmatprep.subr.mxu0 0.0
  %170 = vmatpush1.msra.mxu0 %v52
  %171 = vmatprep.subr.mxu0 0.0
  %172 = vmatpush1.msra.mxu0 %v53
  %173 = vmatprep.subr.mxu0 0.0
  %174 = vmatpush1.msra.mxu0 %v54
  %175 = vmatprep.subr.mxu0 0.0
  %176 = vmatpush1.msra.mxu0 %v55
  %177 = vmatprep.subr.mxu0 0.0
  %178 = vmatpush1.msra.mxu0 %v56
  %179 = vmatprep.subr.mxu0 0.0
  %180 = vmatpush1.msra.mxu0 %v57
  %181 = vmatprep.subr.mxu0 0.0
  %182 = vmatpush1.msra.mxu0 %v58
  %183 = vmatprep.subr.mxu0 0.0
  %184 = vmatpush1.msra.mxu0 %v59
  %185 = vmatprep.subr.mxu0 0.0
  %186 = vmatpush1.msra.mxu0 %v60
  %187 = vmatprep.subr.mxu0 0.0
  %188 = vmatpush1.msra.mxu0 %v61
  %189 = vmatprep.subr.mxu0 0.0
  %190 = vmatpush1.msra.mxu0 %v62
  %191 = vmatprep.subr.mxu0 0.0
  %192 = vmatpush1.msra.mxu0 %v63
  %193 = vmatprep.subr.mxu0 0.0
  %194 = vmatpush1.msra.mxu0 %v64
  %195 = vmatprep.subr.mxu0 0.0
  %196 = vmatpush1.msra.mxu0 %v65
  %197 = vmatprep.subr.mxu0 0.0
  %198 = vmatpush1.msra.mxu0 %v66
  %199 = vmatprep.subr.mxu0 0.0
  %200 = vmatpush1.msra.mxu0 %v67
  %201 = vmatprep.subr.mxu0 0.0
  %202 = vmatpush1.msra.mxu0 %v68
  %203 = vmatprep.subr.mxu0 0.0
  %204 = vmatpush1.msra.mxu0 %v69
  %205 = vmatprep.mubr.f32.mxu0 %v15
  %206 = vmatmul.mubr.f32.gmra.mrb[0].mxu0 %v14
  %v207 = vpop.f32.mrb[0].mxu0
  %v208 = vadd.f32 %v139, %v207
  %v209 = vpop.f32.mrb[0].mxu0
  %210 = vmatprep.mubr.f32.mxu0 %v21
  %211 = vmatmul.mubr.f32.gmra.mrb[0].mxu0 %v20
  %v212 = vpop.f32.mrb[0].mxu0
  %v213 = vadd.f32 %v139, %v212
  %v214 = vpop.f32.mrb[0].mxu0
  %215 = vmatprep.mubr.f32.mxu0 %v27
  %216 = vmatmul.mubr.f32.gmra.mrb[0].mxu0 %v26
  %v217 = vpop.f32.mrb[0].mxu0
  %v218 = vadd.f32 %v139, %v217
  %v219 = vpop.f32.mrb[0].mxu0
  %220 = vmatprep.mubr.f32.mxu0 %v33
  %221 = vmatmul.mubr.f32.gmra.mrb[0].mxu0 %v32
  %v222 = vpop.f32.mrb[0].mxu0
  %v223 = vadd.f32 %v139, %v222
  %v224 = vpop.f32.mrb[0].mxu0
  %225 = vdwg.mxu0
  %226 = vmatprep.subr.mxu0 0.0
  %227 = vmatpush1.msra.mxu0 %v70
  %228 = vmatprep.subr.mxu0 0.0
  %229 = vmatpush1.msra.mxu0 %v71
  %230 = vmatprep.subr.mxu0 0.0
  %231 = vmatpush1.msra.mxu0 %v72
  %232 = vmatprep.subr.mxu0 0.0
  %233 = vmatpush1.msra.mxu0 %v73
  %234 = vmatprep.subr.mxu0 0.0
  %235 = vmatpush1.msra.mxu0 %v74
  %236 = vmatprep.subr.mxu0 0.0
  %237 = vmatpush1.msra.mxu0 %v75
  %238 = vmatprep.subr.mxu0 0.0
  %239 = vmatpush1.msra.mxu0 %v76
  %240 = vmatprep.subr.mxu0 0.0
  %241 = vmatpush1.msra.mxu0 %v77
  %242 = vmatprep.subr.mxu0 0.0
  %243 = vmatpush1.msra.mxu0 %v78
  %244 = vmatprep.subr.mxu0 0.0
  %245 = vmatpush1.msra.mxu0 %v79
  %246 = vmatprep.subr.mxu0 0.0
  %247 = vmatpush1.msra.mxu0 %v80
  %248 = vmatprep.subr.mxu0 0.0
  %249 = vmatpush1.msra.mxu0 %v81
  %250 = vmatprep.subr.mxu0 0.0
  %251 = vmatpush1.msra.mxu0 %v82
  %252 = vmatprep.subr.mxu0 0.0
  %253 = vmatpush1.msra.mxu0 %v83
  %254 = vmatprep.subr.mxu0 0.0
  %255 = vmatpush1.msra.mxu0 %v84
  %256 = vmatprep.subr.mxu0 0.0
  %257 = vmatpush1.msra.mxu0 %v85
  %258 = vmatprep.subr.mxu0 0.0
  %259 = vmatpush1.msra.mxu0 %v86
  %260 = vmatprep.subr.mxu0 0.0
  %261 = vmatpush1.msra.mxu0 %v87
  %262 = vmatprep.subr.mxu0 0.0
  %263 = vmatpush1.msra.mxu0 %v88
  %264 = vmatprep.subr.mxu0 0.0
  %265 = vmatpush1.msra.mxu0 %v89
  %266 = vmatprep.subr.mxu0 0.0
  %267 = vmatpush1.msra.mxu0 %v90
  %268 = vmatprep.subr.mxu0 0.0
  %269 = vmatpush1.msra.mxu0 %v91
  %270 = vmatprep.subr.mxu0 0.0
  %271 = vmatpush1.msra.mxu0 %v92
  %272 = vmatprep.subr.mxu0 0.0
  %273 = vmatpush1.msra.mxu0 %v93
  %274 = vmatprep.subr.mxu0 0.0
  %275 = vmatpush1.msra.mxu0 %v94
  %276 = vmatprep.subr.mxu0 0.0
  %277 = vmatpush1.msra.mxu0 %v95
  %278 = vmatprep.subr.mxu0 0.0
  %279 = vmatpush1.msra.mxu0 %v96
  %280 = vmatprep.subr.mxu0 0.0
  %281 = vmatpush1.msra.mxu0 %v97
  %282 = vmatprep.subr.mxu0 0.0
  %283 = vmatpush1.msra.mxu0 %v98
  %284 = vmatprep.subr.mxu0 0.0
  %285 = vmatpush1.msra.mxu0 %v99
  %286 = vmatprep.subr.mxu0 0.0
  %287 = vmatpush1.msra.mxu0 %v100
  %288 = vmatprep.subr.mxu0 0.0
  %289 = vmatpush1.msra.mxu0 %v101
  %290 = vmatprep.mubr.f32.mxu0 %v17
  %291 = vmatmul.mubr.f32.gmra.mrb[0].mxu0 %v16
  %v292 = vpop.f32.mrb[0].mxu0
  %v293 = vadd.f32 %v208, %v292
  %v294 = vpop.f32.mrb[0].mxu0
  %295 = vmatprep.mubr.f32.mxu0 %v23
  %296 = vmatmul.mubr.f32.gmra.mrb[0].mxu0 %v22
  %v297 = vpop.f32.mrb[0].mxu0
  %v298 = vadd.f32 %v213, %v297
  %v299 = vpop.f32.mrb[0].mxu0
  %300 = vmatprep.mubr.f32.mxu0 %v29
  %301 = vmatmul.mubr.f32.gmra.mrb[0].mxu0 %v28
  %v302 = vpop.f32.mrb[0].mxu0
  %v303 = vadd.f32 %v218, %v302
  %v304 = vpop.f32.mrb[0].mxu0
  %305 = vmatprep.mubr.f32.mxu0 %v35
  %306 = vmatmul.mubr.f32.gmra.mrb[0].mxu0 %v34
  %v307 = vpop.f32.mrb[0].mxu0
  %v308 = vadd.f32 %v223, %v307
  %v309 = vpop.f32.mrb[0].mxu0
  %310 = vdwg.mxu0
  %311 = vmatprep.subr.mxu0 0.0
  %312 = vmatpush1.msra.mxu0 %v102
  %313 = vmatprep.subr.mxu0 0.0
  %314 = vmatpush1.msra.mxu0 %v103
  %315 = vmatprep.subr.mxu0 0.0
  %316 = vmatpush1.msra.mxu0 %v104
  %317 = vmatprep.subr.mxu0 0.0
  %318 = vmatpush1.msra.mxu0 %v105
  %319 = vmatprep.subr.mxu0 0.0
  %320 = vmatpush1.msra.mxu0 %v106
  %321 = vmatprep.subr.mxu0 0.0
  %322 = vmatpush1.msra.mxu0 %v107
  %323 = vmatprep.subr.mxu0 0.0
  %324 = vmatpush1.msra.mxu0 %v108
  %325 = vmatprep.subr.mxu0 0.0
  %326 = vmatpush1.msra.mxu0 %v109
  %327 = vmatprep.subr.mxu0 0.0
  %328 = vmatpush1.msra.mxu0 %v110
  %329 = vmatprep.subr.mxu0 0.0
  %330 = vmatpush1.msra.mxu0 %v111
  %331 = vmatprep.subr.mxu0 0.0
  %332 = vmatpush1.msra.mxu0 %v112
  %333 = vmatprep.subr.mxu0 0.0
  %334 = vmatpush1.msra.mxu0 %v113
  %335 = vmatprep.subr.mxu0 0.0
  %336 = vmatpush1.msra.mxu0 %v114
  %337 = vmatprep.subr.mxu0 0.0
  %338 = vmatpush1.msra.mxu0 %v115
  %339 = vmatprep.subr.mxu0 0.0
  %340 = vmatpush1.msra.mxu0 %v116
  %341 = vmatprep.subr.mxu0 0.0
  %342 = vmatpush1.msra.mxu0 %v117
  %343 = vmatprep.subr.mxu0 0.0
  %344 = vmatpush1.msra.mxu0 %v118
  %345 = vmatprep.subr.mxu0 0.0
  %346 = vmatpush1.msra.mxu0 %v119
  %347 = vmatprep.subr.mxu0 0.0
  %348 = vmatpush1.msra.mxu0 %v120
  %349 = vmatprep.subr.mxu0 0.0
  %350 = vmatpush1.msra.mxu0 %v121
  %351 = vmatprep.subr.mxu0 0.0
  %352 = vmatpush1.msra.mxu0 %v122
  %353 = vmatprep.subr.mxu0 0.0
  %354 = vmatpush1.msra.mxu0 %v123
  %355 = vmatprep.subr.mxu0 0.0
  %356 = vmatpush1.msra.mxu0 %v124
  %357 = vmatprep.subr.mxu0 0.0
  %358 = vmatpush1.msra.mxu0 %v125
  %359 = vmatprep.subr.mxu0 0.0
  %360 = vmatpush1.msra.mxu0 %v126
  %361 = vmatprep.subr.mxu0 0.0
  %362 = vmatpush1.msra.mxu0 %v127
  %363 = vmatprep.subr.mxu0 0.0
  %364 = vmatpush1.msra.mxu0 %v128
  %365 = vmatprep.subr.mxu0 0.0
  %366 = vmatpush1.msra.mxu0 %v129
  %367 = vmatprep.subr.mxu0 0.0
  %368 = vmatpush1.msra.mxu0 %v130
  %369 = vmatprep.subr.mxu0 0.0
  %370 = vmatpush1.msra.mxu0 %v131
  %371 = vmatprep.subr.mxu0 0.0
  %372 = vmatpush1.msra.mxu0 %v132
  %373 = vmatprep.subr.mxu0 0.0
  %374 = vmatpush1.msra.mxu0 %v133
  %375 = vmatprep.mubr.f32.mxu0 %v19
  %376 = vmatmul.mubr.f32.gmra.mrb[0].mxu0 %v18
  %v377 = vpop.f32.mrb[0].mxu0
  %v378 = vadd.f32 %v293, %v377
  %v379 = vpop.f32.mrb[0].mxu0
  %380 = vmatprep.mubr.f32.mxu0 %v25
  %381 = vmatmul.mubr.f32.gmra.mrb[0].mxu0 %v24
  %v382 = vpop.f32.mrb[0].mxu0
  %v383 = vadd.f32 %v298, %v382
  %v384 = vpop.f32.mrb[0].mxu0
  %385 = vmatprep.mubr.f32.mxu0 %v31
  %386 = vmatmul.mubr.f32.gmra.mrb[0].mxu0 %v30
  %v387 = vpop.f32.mrb[0].mxu0
  %v388 = vadd.f32 %v303, %v387
  %v389 = vpop.f32.mrb[0].mxu0
  %390 = vmatprep.mubr.f32.mxu0 %v37
  %391 = vmatmul.mubr.f32.gmra.mrb[0].mxu0 %v36
  %v392 = vpop.f32.mrb[0].mxu0
  %v393 = vadd.f32 %v308, %v392
  %v394 = vpop.f32.mrb[0].mxu0
  %395 = vdwg.mxu0
  %vm396 = vcmask 64512
  %397 = vst.msk [vmem:[%s3] sm:$0xff] %vm396, %v378
  %398 = vst.msk [vmem:[%s3 + $0x8] sm:$0xff] %vm396, %v383
  %399 = vst.msk [vmem:[%s3 + $0x10] sm:$0xff] %vm396, %v388
  %400 = vst.msk [vmem:[%s3 + $0x18] sm:$0xff] %vm396, %v393
  // Predicated region
  $region14: #{tpu_custom_call.1} parent=0 // pred_check
    _
  $region15: #{tpu_custom_call.1} parent=0 // pred_check_branch
    %402 = sbr.rel (0) target = $region17
  $region16: #{tpu_custom_call.1} parent=0 // pred_region
    _
  $region17: #{tpu_custom_call.1} parent=0 // pred_fallthru
    _
  // Predicated region
  $region18: #{tpu_custom_call.1} parent=0 // pred_check
    _
  $region19: #{tpu_custom_call.1} parent=0 // pred_check_branch
    %404 = sbr.rel (0) target = $region21
  $region20: #{tpu_custom_call.1} parent=0 // pred_region
    _
  $region21: #{tpu_custom_call.1} parent=0 // pred_fallthru
    _

</llo_original>
